<compile_context>
chip_gen: v7x
topology: tpu7x:2x2x1
jax: 0.10.0
libtpu: 0.0.40
codegen_flags: <defaults>
</compile_context>

<pallas_src>
import numpy as np

import jax
import jax.numpy as jnp
from jax import lax
from jax.experimental import pallas as pl
from jax.experimental.pallas import tpu as pltpu


def _choose_tile_b(batch: int, num_features: int, target_bytes: int = 4 << 20) -> int:
    """Pick a batch tile: ~4 MiB of f32 x per block, multiple of 8 rows."""
    if batch <= 8:
        return batch
    rows = max(8, target_bytes // (4 * num_features))
    rows = min(rows, 1024)
    tile = min(batch, int(rows))
    return max(8, (tile // 8) * 8)


def _make_perceptron_kernel(dropout_rate: float, training: bool, tile_b: int):
    p = float(dropout_rate)
    apply_dropout = bool(training) and p > 0.0
    scale = 1.0 / (1.0 - p) if apply_dropout else 1.0
    # uint32 threshold: keep element iff hash >= thr  =>  P[keep] = 1 - p
    thr = min(int(round(p * (2.0 ** 32))), (1 << 32) - 1)

    def perceptron_kernel(seed_ref, x_ref, w_ref, b_ref, o_ref):
        x = x_ref[...]                                   # [tile_b, F] f32
        # Fold the dropout 1/(1-p) scale into the tiny [1, F] weight once per
        # block instead of scaling every x element.
        w = w_ref[...] * jnp.float32(scale)              # [1, F]

        if apply_dropout:
            # Counter-based hash PRNG (murmur-style finalizer) over global
            # (row, col) indices + seed. Portable (no pltpu.prng_*), and the
            # mask does not depend on how the batch is tiled.
            row0 = (pl.program_id(0) * tile_b).astype(jnp.uint32)
            r = lax.broadcasted_iota(jnp.uint32, x.shape, 0) + row0
            c = lax.broadcasted_iota(jnp.uint32, x.shape, 1)
            h = (r * jnp.uint32(0x9E3779B1)
                 + c * jnp.uint32(0x85EBCA77)
                 + seed_ref[0].astype(jnp.uint32))
            h = h ^ (h >> 16)
            h = h * jnp.uint32(0x7FEB352D)
            h = h ^ (h >> 15)
            h = h * jnp.uint32(0x846CA68B)
            h = h ^ (h >> 16)
            keep = h >= jnp.uint32(thr)
            x = jnp.where(keep, x, jnp.float32(0.0))

        # Linear with out_features=1: VPU multiply + row-reduce (XLU). The MXU
        # would be almost entirely idle for N=1, and the kernel is mem-bound.
        out = jnp.sum(x * w, axis=-1, keepdims=True)     # [tile_b, 1]
        o_ref[...] = out + b_ref[...]

    return perceptron_kernel


def perceptron_forward(x, weight, bias, seed, *, dropout_rate=0.5, training=True):
    """x: [B, F] f32, weight: [1, F] f32, bias: [1, 1] f32, seed: [1] int32."""
    B, F = x.shape
    assert weight.shape == (1, F)
    assert bias.shape == (1, 1)

    tile_b = _choose_tile_b(B, F)
    grid = (pl.cdiv(B, tile_b),)
    kernel = _make_perceptron_kernel(dropout_rate, training, tile_b)

    return pl.pallas_call(
        kernel,
        out_shape=jax.ShapeDtypeStruct((B, 1), jnp.float32),
        grid_spec=pltpu.PrefetchScalarGridSpec(
            num_scalar_prefetch=1,                      # seed -> SMEM
            grid=grid,
            in_specs=[
                pl.BlockSpec((tile_b, F), lambda i, seed_ref: (i, 0)),  # x tiled over B
                pl.BlockSpec((1, F), lambda i, seed_ref: (0, 0)),       # weight resident
                pl.BlockSpec((1, 1), lambda i, seed_ref: (0, 0)),       # bias resident
            ],
            out_specs=pl.BlockSpec((tile_b, 1), lambda i, seed_ref: (i, 0)),
        ),
        compiler_params=pltpu.CompilerParams(
            # Batch tiles are independent -> shard across v7x's 2 TensorCores.
            dimension_semantics=("parallel",),
        ),
    )(seed, x, weight, bias)


if __name__ == "__main__":
    key = jax.random.PRNGKey(0)
    k_x, k_w, k_b = jax.random.split(key, 3)

    B, F = 8, 32  # small shapes: batch=8, num_features=32

    x = jax.random.normal(k_x, (B, F), dtype=jnp.float32)

    # Parameter init mimicking nn.Linear's uniform(-1/sqrt(F), 1/sqrt(F)),
    # stored in PyTorch layout: weight [1, F], bias [1, 1].
    bound = 1.0 / float(np.sqrt(F))
    weight = jax.random.uniform(k_w, (1, F), minval=-bound, maxval=bound,
                                dtype=jnp.float32)
    bias = jax.random.uniform(k_b, (1, 1), minval=-bound, maxval=bound,
                              dtype=jnp.float32)

    seed = jnp.array([1234], dtype=jnp.int32)

    # Training-mode forward (dropout active), as in the PyTorch module's default mode.
    out_train = perceptron_forward(x, weight, bias, seed,
                                   dropout_rate=0.5, training=True)
    out_train = jax.block_until_ready(out_train)
    assert out_train.shape == (B, 1) and out_train.dtype == jnp.float32
    assert bool(jnp.all(jnp.isfinite(out_train)))

    # Eval-mode forward (dropout = identity) — check against plain-JAX reference.
    out_eval = perceptron_forward(x, weight, bias, seed,
                                  dropout_rate=0.5, training=False)
    out_eval = jax.block_until_ready(out_eval)
    ref = x @ weight.T + bias
    assert jnp.allclose(out_eval, ref, atol=1e-5, rtol=1e-5)

    print("KERNEL_OK")
</pallas_src>

<mosaic_0001>
module attributes {stable_mosaic.version = 11 : i64} {
  func.func @perceptron_kernel(%arg0: i32, %arg1: memref<1xi32, #tpu.memory_space<smem>>, %arg2: memref<8x32xf32, #tpu.memory_space<vmem>>, %arg3: memref<1x32xf32, #tpu.memory_space<vmem>>, %arg4: memref<1x1xf32, #tpu.memory_space<vmem>>, %arg5: memref<8x1xf32, #tpu.memory_space<vmem>>) attributes {dimension_semantics = [#tpu.dimension_semantics<parallel>], iteration_bounds = array<i64: 1>, scalar_prefetch = 1 : i64, scratch_operands = 0 : i64, tpu.core_type = #tpu.core_type<tc>, window_params = [{transform_indices = @transform_0, window_bounds = array<i64: 8, 32>}, {pipeline_mode = #tpu.pipeline_mode<synchronous>, transform_indices = @transform_1, window_bounds = array<i64: 1, 32>}, {pipeline_mode = #tpu.pipeline_mode<synchronous>, transform_indices = @transform_2, window_bounds = array<i64: 1, 1>}, {transform_indices = @transform_3, window_bounds = array<i64: 8, 1>}]} {
    %c0 = arith.constant 0 : index
    %c0_0 = arith.constant 0 : index
    %0 = vector.load %arg2[%c0, %c0_0] : memref<8x32xf32, #tpu.memory_space<vmem>>, vector<8x32xf32>
    %c0_1 = arith.constant 0 : index
    %c0_2 = arith.constant 0 : index
    %1 = vector.load %arg3[%c0_1, %c0_2] : memref<1x32xf32, #tpu.memory_space<vmem>>, vector<1x32xf32>
    %cst = arith.constant 2.000000e+00 : f32
    %2 = vector.broadcast %cst : f32 to vector<1x32xf32>
    %3 = arith.mulf %1, %2 : vector<1x32xf32>
    %c8_i32 = arith.constant 8 : i32
    %4 = arith.muli %arg0, %c8_i32 : i32
    %5 = tpu.iota {dimensions = array<i32: 0>} : vector<8x32xi32>
    %6 = vector.broadcast %4 : i32 to vector<8x32xi32>
    %7 = arith.addi %5, %6 : vector<8x32xi32>
    %8 = tpu.iota {dimensions = array<i32: 1>} : vector<8x32xi32>
    %c-1640531535_i32 = arith.constant -1640531535 : i32
    %9 = vector.broadcast %c-1640531535_i32 : i32 to vector<8x32xi32>
    %10 = arith.muli %7, %9 : vector<8x32xi32>
    %c-2048144777_i32 = arith.constant -2048144777 : i32
    %11 = vector.broadcast %c-2048144777_i32 : i32 to vector<8x32xi32>
    %12 = arith.muli %8, %11 : vector<8x32xi32>
    %13 = arith.addi %10, %12 : vector<8x32xi32>
    %c0_3 = arith.constant 0 : index
    %14 = memref.load %arg1[%c0_3] : memref<1xi32, #tpu.memory_space<smem>>
    %15 = vector.broadcast %14 : i32 to vector<8x32xi32>
    %16 = arith.addi %13, %15 : vector<8x32xi32>
    %c16_i32 = arith.constant 16 : i32
    %17 = vector.broadcast %c16_i32 : i32 to vector<8x32xi32>
    %18 = arith.shrui %16, %17 : vector<8x32xi32>
    %19 = arith.xori %16, %18 : vector<8x32xi32>
    %c2146121005_i32 = arith.constant 2146121005 : i32
    %20 = vector.broadcast %c2146121005_i32 : i32 to vector<8x32xi32>
    %21 = arith.muli %19, %20 : vector<8x32xi32>
    %c15_i32 = arith.constant 15 : i32
    %22 = vector.broadcast %c15_i32 : i32 to vector<8x32xi32>
    %23 = arith.shrui %21, %22 : vector<8x32xi32>
    %24 = arith.xori %21, %23 : vector<8x32xi32>
    %c-2073254261_i32 = arith.constant -2073254261 : i32
    %25 = vector.broadcast %c-2073254261_i32 : i32 to vector<8x32xi32>
    %26 = arith.muli %24, %25 : vector<8x32xi32>
    %c16_i32_4 = arith.constant 16 : i32
    %27 = vector.broadcast %c16_i32_4 : i32 to vector<8x32xi32>
    %28 = arith.shrui %26, %27 : vector<8x32xi32>
    %29 = arith.xori %26, %28 : vector<8x32xi32>
    %c-2147483648_i32 = arith.constant -2147483648 : i32
    %30 = vector.broadcast %c-2147483648_i32 : i32 to vector<8x32xi32>
    %31 = arith.cmpi uge, %29, %30 : vector<8x32xi32>
    %cst_5 = arith.constant 0.000000e+00 : f32
    %32 = vector.broadcast %cst_5 : f32 to vector<8x32xf32>
    %33 = arith.select %31, %0, %32 : vector<8x32xi1>, vector<8x32xf32>
    %34 = vector.broadcast %3 : vector<1x32xf32> to vector<8x32xf32>
    %35 = arith.mulf %33, %34 : vector<8x32xf32>
    %cst_6 = arith.constant dense<0.000000e+00> : vector<8xf32>
    %36 = vector.multi_reduction <add>, %35, %cst_6 [1] : vector<8x32xf32> to vector<8xf32>
    %37 = vector.shape_cast %36 : vector<8xf32> to vector<8x1xf32>
    %c0_7 = arith.constant 0 : index
    %c0_8 = arith.constant 0 : index
    %38 = vector.load %arg4[%c0_7, %c0_8] : memref<1x1xf32, #tpu.memory_space<vmem>>, vector<1x1xf32>
    %39 = vector.broadcast %38 : vector<1x1xf32> to vector<8x1xf32>
    %40 = arith.addf %37, %39 : vector<8x1xf32>
    %c0_9 = arith.constant 0 : index
    %c0_10 = arith.constant 0 : index
    %41 = vector.load %arg5[%c0_9, %c0_10] : memref<8x1xf32, #tpu.memory_space<vmem>>, vector<8x1xf32>
    tpu.vector_store %arg5[%c0_9, %c0_10], %40 {strides = array<i32>} : memref<8x1xf32, #tpu.memory_space<vmem>>, vector<8x1xf32>,
    return
  }
  func.func @transform_0(%arg0: i32, %arg1: memref<1xi32, #tpu.memory_space<smem>>) -> (i32, i32) {
    %c0_i32 = arith.constant 0 : i32
    %c0_i32_0 = arith.constant 0 : i32
    return %arg0, %c0_i32 : i32, i32
  }
  func.func @transform_1(%arg0: i32, %arg1: memref<1xi32, #tpu.memory_space<smem>>) -> (i32, i32) {
    %c0_i32 = arith.constant 0 : i32
    %c0_i32_0 = arith.constant 0 : i32
    %c0_i32_1 = arith.constant 0 : i32
    return %c0_i32, %c0_i32_0 : i32, i32
  }
  func.func @transform_2(%arg0: i32, %arg1: memref<1xi32, #tpu.memory_space<smem>>) -> (i32, i32) {
    %c0_i32 = arith.constant 0 : i32
    %c0_i32_0 = arith.constant 0 : i32
    %c0_i32_1 = arith.constant 0 : i32
    return %c0_i32, %c0_i32_0 : i32, i32
  }
  func.func @transform_3(%arg0: i32, %arg1: memref<1xi32, #tpu.memory_space<smem>>) -> (i32, i32) {
    %c0_i32 = arith.constant 0 : i32
    %c0_i32_0 = arith.constant 0 : i32
    return %arg0, %c0_i32 : i32, i32
  }
}

</mosaic_0001>

<llo_original>
// kernel: tpu_custom_call.1
$region0: #{tpu_custom_call.1}
  #allocation0 [shape = 'u32[]', space=smem, size = 0x4, offset = 0x4, fixed_abs, tag = 'smem constant byte address 0x4 - core index']
  #allocation1 [shape = 'u32[144,128]{1,0:T(1,128)}', space=vmem, size = 0x12000, scoped, tag = 'internal scratch']
  #allocation2 [shape = 's32[1]{0}', space=sflag, size = 0x4, scoped, tag = 'scoped memory for tpu_custom_call.1']
  #allocation3 [shape = 's32[1]{0:T(128)S(6)}', space=smem, size = 0x200, scoped, tag = 'prefetched SMEM operand 0']
  #allocation4 [shape = 'f32[1,1]{1,0:T(1,128)S(1)}', space=vmem, size = 0x200, scoped, tag = 'scoped memory for tpu_custom_call.1']
  %s0 = inlined_call_operand.<no memory space> [shape: s32[1], index: 0, kind: input, shape index: {}]
  %s1 = inlined_call_operand.hbm [shape: f32[8,32], index: 1, kind: input, shape index: {}]
  %s2 = inlined_call_operand.vmem [shape: f32[1,32], index: 2, kind: input, shape index: {}]
  %s3 = inlined_call_operand.<no memory space> [shape: f32[1,1], index: 3, kind: input, shape index: {}]
  %s4 = inlined_call_operand.vmem [shape: f32[8,1], index: 4, kind: output, shape index: {}]
  %s5 = sld [smem:[#allocation0]]
  $region26: #{tpu_custom_call.1} parent=0
    _
  %s7 = ssub.s32 1, %s5
  %s8 = scalar_select 0, %s7, %s5
  %9 = sst [smem:[#allocation3]] %s0
  %v10 = vstv %s3
  %11 = vst [vmem:[#allocation4] sm:$0x1] %v10
  $region1: #{tpu_custom_call.1} parent=0
    #allocation5 [shape = 'u8[4096]{0}', space=vmem, size = 0x1000, scoped, tag = 'input window, operand 1, single buffered']
    #allocation6 [shape = 's32[1]{0}', space=sflag, size = 0x4, scoped, tag = 'scoped memory for tpu_custom_call.1']
    %12 = vsyncpa [#allocation6], 0
    // Predicated region
    $region2: #{tpu_custom_call.1} parent=1 // pred_check
      _
    $region3: #{tpu_custom_call.1} parent=1 // pred_check_branch
      %14 = sbr.rel (0) target = $region5
    $region4: #{tpu_custom_call.1} parent=1 // pred_region
      %s16 = ssub.s32 128, 128
      %17 = vsyncadd [#allocation6], %s16
      %s19 = sshll.u32 [#allocation5], 4
      %s20 = int_to_ptr.vmem [resolvable:$true] %s19
      %22 = dma.hbm_to_vmem [thread:$0]  %s1, 128, %s20, [#allocation6]
    $region5: #{tpu_custom_call.1} parent=1 // pred_fallthru
      _
    // Predicated region
    $region6: #{tpu_custom_call.1} parent=1 // pred_check
      _
    $region7: #{tpu_custom_call.1} parent=1 // pred_check_branch
      %24 = sbr.rel (0) target = $region9
    $region8: #{tpu_custom_call.1} parent=1 // pred_region
      _
    $region9: #{tpu_custom_call.1} parent=1 // pred_fallthru
      _
    // Predicated region
    $region10: #{tpu_custom_call.1} parent=1 // pred_check
      _
    $region11: #{tpu_custom_call.1} parent=1 // pred_check_branch
      %26 = sbr.rel (0) target = $region13
    $region12: #{tpu_custom_call.1} parent=1 // pred_region
      _
    $region13: #{tpu_custom_call.1} parent=1 // pred_fallthru
      _
    // Predicated region
    $region14: #{tpu_custom_call.1} parent=1 // pred_check
      _
    $region15: #{tpu_custom_call.1} parent=1 // pred_check_branch
      %28 = sbr.rel (0) target = $region17
    $region16: #{tpu_custom_call.1} parent=1 // pred_region
      %29 = dma.done [#allocation6], 128
    $region17: #{tpu_custom_call.1} parent=1 // pred_fallthru
      _
    %v30 = vld [vmem:[#allocation5] sm:$0xff]
    %v31 = vld [vmem:[%s2] sm:$0x1]
    %v32 = vmul.f32 %v31, 2.0
    %s33 = smul.u32 0, 8
    %v34 = vlaneseq
    %v35 = vshrl.u32 %v34, 7
    %v36 = vstv %s33
    %v37 = vadd.s32 %v35, %v36
    %v38 = vlaneseq
    %v39 = vand.u32 %v38, 127
    %v40 = vmul.u32 %v37, 2654435761
    %v41 = vmul.u32 %v39, 2246822519
    %v42 = vadd.s32 %v40, %v41
    %s43 = sld [smem:[#allocation3]]
    %v44 = vstv %s43
    %v45 = vadd.s32 %v42, %v44
    %v46 = vshrl.u32 %v45, 16
    %v47 = vxor.u32 %v45, %v46
    %v48 = vmul.u32 %v47, 2146121005
    %v49 = vshrl.u32 %v48, 15
    %v50 = vxor.u32 %v48, %v49
    %v51 = vmul.u32 %v50, 2221713035
    %v52 = vshrl.u32 %v51, 16
    %v53 = vxor.u32 %v51, %v52
    %vm54 = vcmp.ge.u32.totalorder %v53, 2147483648
    %v55 = vsel %vm54, %v30, 0.0
    %v57 = vlaneseq
    %v58 = vshrl.u32 %v57, 7
    %v59 = vsub.s32 0, %v58
    %v60 = vrot.slane %v32, %v59
    %v62 = vmul.f32 %v55, %v60
    %vm63 = vcmask 261120
    %v64 = vsel %vm63, %v62, 0.0
    %65 = vadd.xlane.f32.xlu0 %v64
    %v66 = vpop.xlane.xlu0 %65
    %v67 = vld [vmem:[#allocation4] sm:$0x1]
    %v69 = vlaneseq
    %v70 = vshrl.u32 %v69, 7
    %v71 = vsub.s32 0, %v70
    %v72 = vrot.slane %v67, %v71
    %v74 = vadd.f32 %v66, %v72
    %vm75 = vcmask 7168
    %76 = vst.msk [vmem:[%s4] sm:$0xff] %vm75, %v74
    // Predicated region
    $region18: #{tpu_custom_call.1} parent=1 // pred_check
      _
    $region19: #{tpu_custom_call.1} parent=1 // pred_check_branch
      %78 = sbr.rel (0) target = $region21
    $region20: #{tpu_custom_call.1} parent=1 // pred_region
      _
    $region21: #{tpu_custom_call.1} parent=1 // pred_fallthru
      _
    // Predicated region
    $region22: #{tpu_custom_call.1} parent=1 // pred_check
      _
    $region23: #{tpu_custom_call.1} parent=1 // pred_check_branch
      %80 = sbr.rel (0) target = $region25
    $region24: #{tpu_custom_call.1} parent=1 // pred_region
      _
    $region25: #{tpu_custom_call.1} parent=1 // pred_fallthru
      _
    %81 = vsyncpa [#allocation6], 1

</llo_original>
